<compile_context>
chip_gen: v6e
topology: v6e:2x2x1
jax: 0.10.0
libtpu: 0.0.40
codegen_flags: <defaults>
</compile_context>

<pallas_src>
import functools

import jax
import jax.numpy as jnp
from jax.experimental import pallas as pl
from jax.experimental.pallas import tpu as pltpu


def _round_up(n, m):
    return ((n + m - 1) // m) * m


def _default_act_dtype():
    """bf16 activations only on chips with bf16 VPU/EUP (v6e / v7x)."""
    try:
        kind = jax.devices()[0].device_kind.lower()
    except Exception:
        return jnp.float32
    if ("v6" in kind) or ("v7" in kind) or ("7x" in kind):
        return jnp.bfloat16
    return jnp.float32


def _mlp_kernel(x_ref, w1_ref, b1_ref, w2_ref, b2_ref, w3_ref, b3_ref, o_ref,
                *, act_dtype):
    """Fused 3-layer MLP on one batch tile; activations are (features, TILE_B)."""
    xt = x_ref[...]                                   # (2, TILE_B) f32, batch on lanes

    # Layer 1: Linear(2 -> 64) + Tanh.  K=2 contraction on the (idle) MXU,
    # f32 accumulation; pre-activation cast to act_dtype for the EUP tanh.
    h1 = jnp.dot(w1_ref[...], xt, preferred_element_type=jnp.float32) + b1_ref[...]
    h1 = jnp.tanh(h1.astype(act_dtype))               # (64, TILE_B)

    # Layer 2: Linear(64 -> 32) + Tanh.  MXU matmul at native act_dtype rate,
    # f32 accumulation.
    h2 = jnp.dot(w2_ref[...], h1, preferred_element_type=jnp.float32) + b2_ref[...]
    h2 = jnp.tanh(h2.astype(act_dtype))               # (32, TILE_B)

    # Layer 3: Linear(32 -> 2), f32 output.
    out = jnp.dot(w3_ref[...], h2, preferred_element_type=jnp.float32) + b3_ref[...]
    o_ref[...] = out.astype(o_ref.dtype)              # (2, TILE_B), lane-dense stores


@functools.partial(jax.jit, static_argnames=("tile_b", "act_dtype", "min_grid_steps"))
def mlp_forward(x, params, tile_b=8192, act_dtype=None, min_grid_steps=2):
    """x: (B, 2) float32 -> (B, 2) float32, matching the PyTorch forward."""
    w1, b1, w2, b2, w3, b3 = params
    if act_dtype is None:
        act_dtype = _default_act_dtype()

    B = x.shape[0]
    b128 = _round_up(max(B, 1), 128)

    # Tile sizing: cap at `tile_b` lanes, prefer >= min_grid_steps evenly-sized
    # grid steps (megacore sharding on v7x) when the batch is large enough, and
    # keep tiles 128-aligned so stores stay unmasked.
    max_tile = max(128, min(tile_b, b128))
    n_steps = pl.cdiv(b128, max_tile)
    n_steps = max(1, min(max(n_steps, min_grid_steps), b128 // 128))
    tile_b = _round_up(pl.cdiv(b128, n_steps), 128)
    b_pad = n_steps * tile_b

    # Batch-on-lanes layout: (2, b_pad); padded columns are sliced off below.
    # TODO(synk): if the surrounding model can consume feature-major (2, B)
    # activations, this transpose/pad and the final slice/transpose disappear.
    x_t = jnp.pad(x.astype(jnp.float32).T, ((0, 0), (0, b_pad - B)))

    # Weights that feed the MXU at act_dtype rate; layer-1 weights and all
    # biases stay f32 (f32 accumulation everywhere).
    w2c = w2.astype(act_dtype)
    w3c = w3.astype(act_dtype)

    def resident_spec(arr):
        # Whole (tiny) parameter as one block, same block every grid step ->
        # stays resident in VMEM across the batch loop.
        return pl.BlockSpec(arr.shape, lambda i: (0, 0))

    flops = 2 * b_pad * (2 * 64 + 64 * 32 + 32 * 2)
    param_bytes = 4 * (64 * 2 + 64 + 32 * 64 + 32 + 2 * 32 + 2)
    bytes_accessed = 4 * (2 * b_pad) * 2 + param_bytes

    kernel = functools.partial(_mlp_kernel, act_dtype=act_dtype)

    out_t = pl.pallas_call(
        kernel,
        out_shape=jax.ShapeDtypeStruct((2, b_pad), jnp.float32),
        grid=(n_steps,),
        in_specs=[
            pl.BlockSpec((2, tile_b), lambda i: (0, i)),
            resident_spec(w1), resident_spec(b1),
            resident_spec(w2c), resident_spec(b2),
            resident_spec(w3c), resident_spec(b3),
        ],
        out_specs=pl.BlockSpec((2, tile_b), lambda i: (0, i)),
        compiler_params=pltpu.CompilerParams(
            dimension_semantics=("parallel",),
        ),
        cost_estimate=pl.CostEstimate(
            flops=flops,
            transcendentals=b_pad * (64 + 32),
            bytes_accessed=bytes_accessed,
        ),
    )(x_t, w1, b1, w2c, b2, w3c, b3)

    return out_t[:, :B].T                             # back to (B, 2)


def init_params(key):
    """Deterministic init mimicking nn.Linear default U(-1/sqrt(fan_in), 1/sqrt(fan_in)).

    Weights keep the PyTorch (out_features, in_features) convention; biases are
    stored as (out_features, 1) so they broadcast along the lane (batch) axis
    inside the kernel.
    """
    dims = [(64, 2), (32, 64), (2, 32)]
    params = []
    for (out_f, in_f) in dims:
        key, kw, kb = jax.random.split(key, 3)
        bound = 1.0 / (in_f ** 0.5)
        w = jax.random.uniform(kw, (out_f, in_f), jnp.float32, -bound, bound)
        b = jax.random.uniform(kb, (out_f, 1), jnp.float32, -bound, bound)
        params.extend([w, b])
    return tuple(params)


def reference_forward(x, params):
    """Plain-JAX reference of the PyTorch forward."""
    w1, b1, w2, b2, w3, b3 = params
    h1 = jnp.tanh(x @ w1.T + b1.T)
    h2 = jnp.tanh(h1 @ w2.T + b2.T)
    return h2 @ w3.T + b3.T


if __name__ == "__main__":
    key = jax.random.PRNGKey(0)
    k_x, k_x2, k_p = jax.random.split(key, 3)
    params = init_params(k_p)

    # 1) Exact f32 path, small batch (single 128-wide tile, padding exercised).
    batch = 8
    x = jax.random.normal(k_x, (batch, 2), jnp.float32)
    out = jax.block_until_ready(mlp_forward(x, params, act_dtype=jnp.float32))
    ref = reference_forward(x, params)
    assert out.shape == (batch, 2)
    assert jnp.allclose(out, ref, atol=1e-5, rtol=1e-5)

    # 2) Non-multiple-of-128 batch with multiple grid steps, device-default
    #    activation dtype (bf16 on v6e/v7x, f32 on v5e) -> exercises padding,
    #    the batch grid, megacore sharding, and resident weights.
    batch2 = 300
    x2 = jax.random.normal(k_x2, (batch2, 2), jnp.float32)
    act = _default_act_dtype()
    out2 = jax.block_until_ready(mlp_forward(x2, params, tile_b=128))
    ref2 = reference_forward(x2, params)
    tol = 1e-5 if act == jnp.float32 else 5e-2
    assert out2.shape == (batch2, 2)
    assert jnp.allclose(out2, ref2, atol=tol, rtol=tol)

    # 3) Larger batch with the default (big) tile size, forced f32 for an exact
    #    check of the auto tile-sizing path.
    batch3 = 1000
    x3 = jax.random.normal(jax.random.PRNGKey(3), (batch3, 2), jnp.float32)
    out3 = jax.block_until_ready(mlp_forward(x3, params, act_dtype=jnp.float32))
    ref3 = reference_forward(x3, params)
    assert out3.shape == (batch3, 2)
    assert jnp.allclose(out3, ref3, atol=1e-5, rtol=1e-5)

    print("KERNEL_OK")
</pallas_src>

<mosaic_0001>
module attributes {stable_mosaic.version = 11 : i64} {
  func.func @_mlp_kernel(%arg0: i32, %arg1: memref<2x128xf32, #tpu.memory_space<vmem>>, %arg2: memref<64x2xf32, #tpu.memory_space<vmem>>, %arg3: memref<64x1xf32, #tpu.memory_space<vmem>>, %arg4: memref<32x64xf32, #tpu.memory_space<vmem>>, %arg5: memref<32x1xf32, #tpu.memory_space<vmem>>, %arg6: memref<2x32xf32, #tpu.memory_space<vmem>>, %arg7: memref<2x1xf32, #tpu.memory_space<vmem>>, %arg8: memref<2x128xf32, #tpu.memory_space<vmem>>) attributes {dimension_semantics = [#tpu.dimension_semantics<parallel>], iteration_bounds = array<i64: 1>, scalar_prefetch = 0 : i64, scratch_operands = 0 : i64, tpu.core_type = #tpu.core_type<tc>, window_params = [{transform_indices = @transform_0, window_bounds = array<i64: 2, 128>}, {pipeline_mode = #tpu.pipeline_mode<synchronous>, transform_indices = @transform_1, window_bounds = array<i64: 64, 2>}, {pipeline_mode = #tpu.pipeline_mode<synchronous>, transform_indices = @transform_2, window_bounds = array<i64: 64, 1>}, {pipeline_mode = #tpu.pipeline_mode<synchronous>, transform_indices = @transform_3, window_bounds = array<i64: 32, 64>}, {pipeline_mode = #tpu.pipeline_mode<synchronous>, transform_indices = @transform_4, window_bounds = array<i64: 32, 1>}, {pipeline_mode = #tpu.pipeline_mode<synchronous>, transform_indices = @transform_5, window_bounds = array<i64: 2, 32>}, {pipeline_mode = #tpu.pipeline_mode<synchronous>, transform_indices = @transform_6, window_bounds = array<i64: 2, 1>}, {transform_indices = @transform_7, window_bounds = array<i64: 2, 128>}]} {
    %c0 = arith.constant 0 : index
    %c0_0 = arith.constant 0 : index
    %0 = vector.load %arg1[%c0, %c0_0] : memref<2x128xf32, #tpu.memory_space<vmem>>, vector<2x128xf32>
    %c0_1 = arith.constant 0 : index
    %c0_2 = arith.constant 0 : index
    %1 = vector.load %arg2[%c0_1, %c0_2] : memref<64x2xf32, #tpu.memory_space<vmem>>, vector<64x2xf32>
    %cst = arith.constant dense<0.000000e+00> : vector<64x128xf32>
    %2 = tpu.matmul %1, %0, %cst {dimension_numbers = #tpu.dot_dimension_numbers<[1], [0], [0], [1], [0, 0, 1, 1], [], []>} : vector<64x2xf32>, vector<2x128xf32>, vector<64x128xf32> -> vector<64x128xf32>
    %c0_3 = arith.constant 0 : index
    %c0_4 = arith.constant 0 : index
    %3 = vector.load %arg3[%c0_3, %c0_4] : memref<64x1xf32, #tpu.memory_space<vmem>>, vector<64x1xf32>
    %4 = vector.broadcast %3 : vector<64x1xf32> to vector<64x128xf32>
    %5 = arith.addf %2, %4 : vector<64x128xf32>
    %6 = math.tanh %5 : vector<64x128xf32>
    %c0_5 = arith.constant 0 : index
    %c0_6 = arith.constant 0 : index
    %7 = vector.load %arg4[%c0_5, %c0_6] : memref<32x64xf32, #tpu.memory_space<vmem>>, vector<32x64xf32>
    %cst_7 = arith.constant dense<0.000000e+00> : vector<32x128xf32>
    %8 = tpu.matmul %7, %6, %cst_7 {dimension_numbers = #tpu.dot_dimension_numbers<[1], [0], [0], [1], [0, 0, 1, 1], [], []>} : vector<32x64xf32>, vector<64x128xf32>, vector<32x128xf32> -> vector<32x128xf32>
    %c0_8 = arith.constant 0 : index
    %c0_9 = arith.constant 0 : index
    %9 = vector.load %arg5[%c0_8, %c0_9] : memref<32x1xf32, #tpu.memory_space<vmem>>, vector<32x1xf32>
    %10 = vector.broadcast %9 : vector<32x1xf32> to vector<32x128xf32>
    %11 = arith.addf %8, %10 : vector<32x128xf32>
    %12 = math.tanh %11 : vector<32x128xf32>
    %c0_10 = arith.constant 0 : index
    %c0_11 = arith.constant 0 : index
    %13 = vector.load %arg6[%c0_10, %c0_11] : memref<2x32xf32, #tpu.memory_space<vmem>>, vector<2x32xf32>
    %cst_12 = arith.constant dense<0.000000e+00> : vector<2x128xf32>
    %14 = tpu.matmul %13, %12, %cst_12 {dimension_numbers = #tpu.dot_dimension_numbers<[1], [0], [0], [1], [0, 0, 1, 1], [], []>} : vector<2x32xf32>, vector<32x128xf32>, vector<2x128xf32> -> vector<2x128xf32>
    %c0_13 = arith.constant 0 : index
    %c0_14 = arith.constant 0 : index
    %15 = vector.load %arg7[%c0_13, %c0_14] : memref<2x1xf32, #tpu.memory_space<vmem>>, vector<2x1xf32>
    %16 = vector.broadcast %15 : vector<2x1xf32> to vector<2x128xf32>
    %17 = arith.addf %14, %16 : vector<2x128xf32>
    %c0_15 = arith.constant 0 : index
    %c0_16 = arith.constant 0 : index
    %18 = vector.load %arg8[%c0_15, %c0_16] : memref<2x128xf32, #tpu.memory_space<vmem>>, vector<2x128xf32>
    tpu.vector_store %arg8[%c0_15, %c0_16], %17 {strides = array<i32>} : memref<2x128xf32, #tpu.memory_space<vmem>>, vector<2x128xf32>,
    return
  }
  func.func @transform_0(%arg0: i32) -> (i32, i32) {
    %c0_i32 = arith.constant 0 : i32
    %c0_i32_0 = arith.constant 0 : i32
    return %c0_i32, %arg0 : i32, i32
  }
  func.func @transform_1(%arg0: i32) -> (i32, i32) {
    %c0_i32 = arith.constant 0 : i32
    %c0_i32_0 = arith.constant 0 : i32
    %c0_i32_1 = arith.constant 0 : i32
    return %c0_i32, %c0_i32_0 : i32, i32
  }
  func.func @transform_2(%arg0: i32) -> (i32, i32) {
    %c0_i32 = arith.constant 0 : i32
    %c0_i32_0 = arith.constant 0 : i32
    %c0_i32_1 = arith.constant 0 : i32
    return %c0_i32, %c0_i32_0 : i32, i32
  }
  func.func @transform_3(%arg0: i32) -> (i32, i32) {
    %c0_i32 = arith.constant 0 : i32
    %c0_i32_0 = arith.constant 0 : i32
    %c0_i32_1 = arith.constant 0 : i32
    return %c0_i32, %c0_i32_0 : i32, i32
  }
  func.func @transform_4(%arg0: i32) -> (i32, i32) {
    %c0_i32 = arith.constant 0 : i32
    %c0_i32_0 = arith.constant 0 : i32
    %c0_i32_1 = arith.constant 0 : i32
    return %c0_i32, %c0_i32_0 : i32, i32
  }
  func.func @transform_5(%arg0: i32) -> (i32, i32) {
    %c0_i32 = arith.constant 0 : i32
    %c0_i32_0 = arith.constant 0 : i32
    %c0_i32_1 = arith.constant 0 : i32
    return %c0_i32, %c0_i32_0 : i32, i32
  }
  func.func @transform_6(%arg0: i32) -> (i32, i32) {
    %c0_i32 = arith.constant 0 : i32
    %c0_i32_0 = arith.constant 0 : i32
    %c0_i32_1 = arith.constant 0 : i32
    return %c0_i32, %c0_i32_0 : i32, i32
  }
  func.func @transform_7(%arg0: i32) -> (i32, i32) {
    %c0_i32 = arith.constant 0 : i32
    %c0_i32_0 = arith.constant 0 : i32
    return %c0_i32, %arg0 : i32, i32
  }
}

</mosaic_0001>

<llo_original>
// kernel: mlp_forward.1
$region0: #{mlp_forward.1}
  #allocation0 [shape = 'u32[]', space=smem, size = 0x4, offset = 0x4, fixed_abs, tag = 'smem constant byte address 0x4 - core index']
  #allocation1 [shape = 'u32[144,128]{1,0:T(1,128)}', space=vmem, size = 0x12000, scoped, tag = 'internal scratch']
  %s0 = inlined_call_operand.vmem [shape: f32[2,128], index: 0, kind: input, shape index: {}]
  %s1 = inlined_call_operand.vmem [shape: f32[64,2], index: 1, kind: input, shape index: {}]
  %s2 = inlined_call_operand.vmem [shape: f32[64,1], index: 2, kind: input, shape index: {}]
  %s3 = inlined_call_operand.vmem [shape: f32[32,64], index: 3, kind: input, shape index: {}]
  %s4 = inlined_call_operand.vmem [shape: f32[32,1], index: 4, kind: input, shape index: {}]
  %s5 = inlined_call_operand.vmem [shape: f32[2,32], index: 5, kind: input, shape index: {}]
  %s6 = inlined_call_operand.vmem [shape: f32[2,1], index: 6, kind: input, shape index: {}]
  %s7 = inlined_call_operand.vmem [shape: f32[2,128], index: 7, kind: output, shape index: {}]
  %s8 = sld [smem:[#allocation0]]
  $region38: #{mlp_forward.1} parent=0
    _
  %s10 = ssub.s32 1, %s8
  %s11 = scalar_select 0, %s10, %s8
  // Predicated region
  $region2: #{mlp_forward.1} parent=0 // pred_check
    _
  $region3: #{mlp_forward.1} parent=0 // pred_check_branch
    %13 = sbr.rel (0) target = $region5
  $region4: #{mlp_forward.1} parent=0 // pred_region
    _
  $region5: #{mlp_forward.1} parent=0 // pred_fallthru
    _
  // Predicated region
  $region6: #{mlp_forward.1} parent=0 // pred_check
    _
  $region7: #{mlp_forward.1} parent=0 // pred_check_branch
    %15 = sbr.rel (0) target = $region9
  $region8: #{mlp_forward.1} parent=0 // pred_region
    _
  $region9: #{mlp_forward.1} parent=0 // pred_fallthru
    _
  // Predicated region
  $region10: #{mlp_forward.1} parent=0 // pred_check
    _
  $region11: #{mlp_forward.1} parent=0 // pred_check_branch
    %17 = sbr.rel (0) target = $region13
  $region12: #{mlp_forward.1} parent=0 // pred_region
    _
  $region13: #{mlp_forward.1} parent=0 // pred_fallthru
    _
  // Predicated region
  $region14: #{mlp_forward.1} parent=0 // pred_check
    _
  $region15: #{mlp_forward.1} parent=0 // pred_check_branch
    %19 = sbr.rel (0) target = $region17
  $region16: #{mlp_forward.1} parent=0 // pred_region
    _
  $region17: #{mlp_forward.1} parent=0 // pred_fallthru
    _
  // Predicated region
  $region18: #{mlp_forward.1} parent=0 // pred_check
    _
  $region19: #{mlp_forward.1} parent=0 // pred_check_branch
    %21 = sbr.rel (0) target = $region21
  $region20: #{mlp_forward.1} parent=0 // pred_region
    _
  $region21: #{mlp_forward.1} parent=0 // pred_fallthru
    _
  // Predicated region
  $region22: #{mlp_forward.1} parent=0 // pred_check
    _
  $region23: #{mlp_forward.1} parent=0 // pred_check_branch
    %23 = sbr.rel (0) target = $region25
  $region24: #{mlp_forward.1} parent=0 // pred_region
    _
  $region25: #{mlp_forward.1} parent=0 // pred_fallthru
    _
  // Predicated region
  $region26: #{mlp_forward.1} parent=0 // pred_check
    _
  $region27: #{mlp_forward.1} parent=0 // pred_check_branch
    %25 = sbr.rel (0) target = $region29
  $region28: #{mlp_forward.1} parent=0 // pred_region
    _
  $region29: #{mlp_forward.1} parent=0 // pred_fallthru
    _
  %v26 = vld [vmem:[%s0] sm:$0x3]
  %v27 = vld [vmem:[%s1] sm:$0xff]
  %v28 = vld [vmem:[%s1 + $0x8] sm:$0xff]
  %v29 = vld [vmem:[%s1 + $0x10] sm:$0xff]
  %v30 = vld [vmem:[%s1 + $0x18] sm:$0xff]
  %v31 = vld [vmem:[%s1 + $0x20] sm:$0xff]
  %v32 = vld [vmem:[%s1 + $0x28] sm:$0xff]
  %v33 = vld [vmem:[%s1 + $0x30] sm:$0xff]
  %v34 = vld [vmem:[%s1 + $0x38] sm:$0xff]
  %v35 = vld [vmem:[%s2] sm:$0xff]
  %v36 = vld [vmem:[%s2 + $0x8] sm:$0xff]
  %v37 = vld [vmem:[%s2 + $0x10] sm:$0xff]
  %v38 = vld [vmem:[%s2 + $0x18] sm:$0xff]
  %v39 = vld [vmem:[%s2 + $0x20] sm:$0xff]
  %v40 = vld [vmem:[%s2 + $0x28] sm:$0xff]
  %v41 = vld [vmem:[%s2 + $0x30] sm:$0xff]
  %v42 = vld [vmem:[%s2 + $0x38] sm:$0xff]
  %44 = vset.pattern.permute.xlu0 0
  %45 = vperm.xlu0 %44, %v35
  %v46 = vpop.permute.xlu0 %45
  %49 = vset.pattern.permute.xlu0 0
  %50 = vperm.xlu0 %49, %v36
  %v51 = vpop.permute.xlu0 %50
  %54 = vset.pattern.permute.xlu0 0
  %55 = vperm.xlu0 %54, %v37
  %v56 = vpop.permute.xlu0 %55
  %59 = vset.pattern.permute.xlu0 0
  %60 = vperm.xlu0 %59, %v38
  %v61 = vpop.permute.xlu0 %60
  %64 = vset.pattern.permute.xlu0 0
  %65 = vperm.xlu0 %64, %v39
  %v66 = vpop.permute.xlu0 %65
  %69 = vset.pattern.permute.xlu0 0
  %70 = vperm.xlu0 %69, %v40
  %v71 = vpop.permute.xlu0 %70
  %74 = vset.pattern.permute.xlu0 0
  %75 = vperm.xlu0 %74, %v41
  %v76 = vpop.permute.xlu0 %75
  %79 = vset.pattern.permute.xlu0 0
  %80 = vperm.xlu0 %79, %v42
  %v81 = vpop.permute.xlu0 %80
  %vm83 = vcmask 15360
  %v85 = vsel %vm83, %v27, 0
  %v88 = vsel %vm83, %v28, 0
  %v91 = vsel %vm83, %v29, 0
  %v94 = vsel %vm83, %v30, 0
  %v97 = vsel %vm83, %v31, 0
  %v100 = vsel %vm83, %v32, 0
  %v103 = vsel %vm83, %v33, 0
  %v106 = vsel %vm83, %v34, 0
  %vm108 = vcmask 1041408
  %v110 = vsel %vm108, %v26, 0
  %112 = vmatprep.subr.mxu0 0.0
  %113 = vmatpush1.msra.mxu0 0.0
  %114 = vmatprep.subr.mxu0 0.0
  %115 = vmatpush1.msra.mxu0 0.0
  %116 = vmatprep.subr.mxu0 0.0
  %117 = vmatpush1.msra.mxu0 0.0
  %118 = vmatprep.subr.mxu0 0.0
  %119 = vmatpush1.msra.mxu0 0.0
  %120 = vmatprep.subr.mxu0 0.0
  %121 = vmatpush1.msra.mxu0 0.0
  %122 = vmatprep.subr.mxu0 0.0
  %123 = vmatpush1.msra.mxu0 0.0
  %124 = vmatprep.subr.mxu0 0.0
  %125 = vmatpush1.msra.mxu0 0.0
  %126 = vmatprep.subr.mxu0 0.0
  %127 = vmatpush1.msra.mxu0 0.0
  %128 = vmatprep.subr.mxu0 0.0
  %129 = vmatpush1.msra.mxu0 0.0
  %130 = vmatprep.subr.mxu0 0.0
  %131 = vmatpush1.msra.mxu0 0.0
  %132 = vmatprep.subr.mxu0 0.0
  %133 = vmatpush1.msra.mxu0 0.0
  %134 = vmatprep.subr.mxu0 0.0
  %135 = vmatpush1.msra.mxu0 0.0
  %136 = vmatprep.subr.mxu0 0.0
  %137 = vmatpush1.msra.mxu0 0.0
  %138 = vmatprep.subr.mxu0 0.0
  %139 = vmatpush1.msra.mxu0 0.0
  %140 = vmatprep.subr.mxu0 0.0
  %141 = vmatpush1.msra.mxu0 0.0
  %142 = vmatprep.subr.mxu0 0.0
  %143 = vmatpush1.msra.mxu0 %v110
  %144 = vmatprep.subr.mxu0 0.0
  %145 = vmatpush2.msra.mxu0 0.0
  %146 = vmatprep.subr.mxu0 0.0
  %147 = vmatpush2.msra.mxu0 0.0
  %148 = vmatprep.subr.mxu0 0.0
  %149 = vmatpush2.msra.mxu0 0.0
  %150 = vmatprep.subr.mxu0 0.0
  %151 = vmatpush2.msra.mxu0 0.0
  %152 = vmatprep.subr.mxu0 0.0
  %153 = vmatpush2.msra.mxu0 0.0
  %154 = vmatprep.subr.mxu0 0.0
  %155 = vmatpush2.msra.mxu0 0.0
  %156 = vmatprep.subr.mxu0 0.0
  %157 = vmatpush2.msra.mxu0 0.0
  %158 = vmatprep.subr.mxu0 0.0
  %159 = vmatpush2.msra.mxu0 0.0
  %160 = vmatprep.subr.mxu0 0.0
  %161 = vmatpush2.msra.mxu0 0.0
  %162 = vmatprep.subr.mxu0 0.0
  %163 = vmatpush2.msra.mxu0 0.0
  %164 = vmatprep.subr.mxu0 0.0
  %165 = vmatpush2.msra.mxu0 0.0
  %166 = vmatprep.subr.mxu0 0.0
  %167 = vmatpush2.msra.mxu0 0.0
  %168 = vmatprep.subr.mxu0 0.0
  %169 = vmatpush2.msra.mxu0 0.0
  %170 = vmatprep.subr.mxu0 0.0
  %171 = vmatpush2.msra.mxu0 0.0
  %172 = vmatprep.subr.mxu0 0.0
  %173 = vmatpush2.msra.mxu0 0.0
  %174 = vmatprep.subr.mxu0 0.0
  %175 = vmatpush2.msra.mxu0 0.0
  %176 = vmatprep.mubr.f32.mxu0 0.0
  %177 = vmatmul.mubr.f32.gmra.mxu0 %v85
  %v178 = vpop.f32.mrf.mxu0
  %v179 = vadd.f32 %v46, %v178
  %v180 = vpop.f32.mrf.mxu0
  %181 = vmatprep.mubr.f32.mxu0 0.0
  %182 = vmatmul.mubr.f32.gmra.mxu0 %v88
  %v183 = vpop.f32.mrf.mxu0
  %v184 = vadd.f32 %v51, %v183
  %v185 = vpop.f32.mrf.mxu0
  %186 = vmatprep.mubr.f32.mxu0 0.0
  %187 = vmatmul.mubr.f32.gmra.mxu0 %v91
  %v188 = vpop.f32.mrf.mxu0
  %v189 = vadd.f32 %v56, %v188
  %v190 = vpop.f32.mrf.mxu0
  %191 = vmatprep.mubr.f32.mxu0 0.0
  %192 = vmatmul.mubr.f32.gmra.mxu0 %v94
  %v193 = vpop.f32.mrf.mxu0
  %v194 = vadd.f32 %v61, %v193
  %v195 = vpop.f32.mrf.mxu0
  %196 = vmatprep.mubr.f32.mxu0 0.0
  %197 = vmatmul.mubr.f32.gmra.mxu0 %v97
  %v198 = vpop.f32.mrf.mxu0
  %v199 = vadd.f32 %v66, %v198
  %v200 = vpop.f32.mrf.mxu0
  %201 = vmatprep.mubr.f32.mxu0 0.0
  %202 = vmatmul.mubr.f32.gmra.mxu0 %v100
  %v203 = vpop.f32.mrf.mxu0
  %v204 = vadd.f32 %v71, %v203
  %v205 = vpop.f32.mrf.mxu0
  %206 = vmatprep.mubr.f32.mxu0 0.0
  %207 = vmatmul.mubr.f32.gmra.mxu0 %v103
  %v208 = vpop.f32.mrf.mxu0
  %v209 = vadd.f32 %v76, %v208
  %v210 = vpop.f32.mrf.mxu0
  %211 = vmatprep.mubr.f32.mxu0 0.0
  %212 = vmatmul.mubr.f32.gmra.mxu0 %v106
  %v213 = vpop.f32.mrf.mxu0
  %v214 = vadd.f32 %v81, %v213
  %v215 = vpop.f32.mrf.mxu0
  %216 = vdwg.mxu0
  %v217 = vtanh.pop %v179
  %v218 = vtanh.pop %v184
  %v219 = vtanh.pop %v189
  %v220 = vtanh.pop %v194
  %v221 = vtanh.pop %v199
  %v222 = vtanh.pop %v204
  %v223 = vtanh.pop %v209
  %v224 = vtanh.pop %v214
  %v225 = vld [vmem:[%s3] sm:$0xff]
  %v226 = vld [vmem:[%s3 + $0x8] sm:$0xff]
  %v227 = vld [vmem:[%s3 + $0x10] sm:$0xff]
  %v228 = vld [vmem:[%s3 + $0x18] sm:$0xff]
  %v229 = vld [vmem:[%s4] sm:$0xff]
  %v230 = vld [vmem:[%s4 + $0x8] sm:$0xff]
  %v231 = vld [vmem:[%s4 + $0x10] sm:$0xff]
  %v232 = vld [vmem:[%s4 + $0x18] sm:$0xff]
  %234 = vset.pattern.permute.xlu0 0
  %235 = vperm.xlu0 %234, %v229
  %v236 = vpop.permute.xlu0 %235
  %239 = vset.pattern.permute.xlu0 0
  %240 = vperm.xlu0 %239, %v230
  %v241 = vpop.permute.xlu0 %240
  %244 = vset.pattern.permute.xlu0 0
  %245 = vperm.xlu0 %244, %v231
  %v246 = vpop.permute.xlu0 %245
  %249 = vset.pattern.permute.xlu0 0
  %250 = vperm.xlu0 %249, %v232
  %v251 = vpop.permute.xlu0 %250
  %vm253 = vcmask 523264
  %v255 = vsel %vm253, %v225, 0
  %v258 = vsel %vm253, %v226, 0
  %v261 = vsel %vm253, %v227, 0
  %v264 = vsel %vm253, %v228, 0
  %266 = vmatprep.subr.mxu0 0.0
  %267 = vmatpush1.msra.mxu0 0.0
  %268 = vmatprep.subr.mxu0 0.0
  %269 = vmatpush1.msra.mxu0 0.0
  %270 = vmatprep.subr.mxu0 0.0
  %271 = vmatpush1.msra.mxu0 0.0
  %272 = vmatprep.subr.mxu0 0.0
  %273 = vmatpush1.msra.mxu0 0.0
  %274 = vmatprep.subr.mxu0 0.0
  %275 = vmatpush1.msra.mxu0 0.0
  %276 = vmatprep.subr.mxu0 0.0
  %277 = vmatpush1.msra.mxu0 0.0
  %278 = vmatprep.subr.mxu0 0.0
  %279 = vmatpush1.msra.mxu0 0.0
  %280 = vmatprep.subr.mxu0 0.0
  %281 = vmatpush1.msra.mxu0 0.0
  %282 = vmatprep.subr.mxu0 0.0
  %283 = vmatpush1.msra.mxu0 %v224
  %284 = vmatprep.subr.mxu0 0.0
  %285 = vmatpush1.msra.mxu0 %v223
  %286 = vmatprep.subr.mxu0 0.0
  %287 = vmatpush1.msra.mxu0 %v222
  %288 = vmatprep.subr.mxu0 0.0
  %289 = vmatpush1.msra.mxu0 %v221
  %290 = vmatprep.subr.mxu0 0.0
  %291 = vmatpush1.msra.mxu0 %v220
  %292 = vmatprep.subr.mxu0 0.0
  %293 = vmatpush1.msra.mxu0 %v219
  %294 = vmatprep.subr.mxu0 0.0
  %295 = vmatpush1.msra.mxu0 %v218
  %296 = vmatprep.subr.mxu0 0.0
  %297 = vmatpush1.msra.mxu0 %v217
  %298 = vmatprep.subr.mxu0 0.0
  %299 = vmatpush2.msra.mxu0 0.0
  %300 = vmatprep.subr.mxu0 0.0
  %301 = vmatpush2.msra.mxu0 0.0
  %302 = vmatprep.subr.mxu0 0.0
  %303 = vmatpush2.msra.mxu0 0.0
  %304 = vmatprep.subr.mxu0 0.0
  %305 = vmatpush2.msra.mxu0 0.0
  %306 = vmatprep.subr.mxu0 0.0
  %307 = vmatpush2.msra.mxu0 0.0
  %308 = vmatprep.subr.mxu0 0.0
  %309 = vmatpush2.msra.mxu0 0.0
  %310 = vmatprep.subr.mxu0 0.0
  %311 = vmatpush2.msra.mxu0 0.0
  %312 = vmatprep.subr.mxu0 0.0
  %313 = vmatpush2.msra.mxu0 0.0
  %314 = vmatprep.subr.mxu0 0.0
  %315 = vmatpush2.msra.mxu0 0.0
  %316 = vmatprep.subr.mxu0 0.0
  %317 = vmatpush2.msra.mxu0 0.0
  %318 = vmatprep.subr.mxu0 0.0
  %319 = vmatpush2.msra.mxu0 0.0
  %320 = vmatprep.subr.mxu0 0.0
  %321 = vmatpush2.msra.mxu0 0.0
  %322 = vmatprep.subr.mxu0 0.0
  %323 = vmatpush2.msra.mxu0 0.0
  %324 = vmatprep.subr.mxu0 0.0
  %325 = vmatpush2.msra.mxu0 0.0
  %326 = vmatprep.subr.mxu0 0.0
  %327 = vmatpush2.msra.mxu0 0.0
  %328 = vmatprep.subr.mxu0 0.0
  %329 = vmatpush2.msra.mxu0 0.0
  %330 = vmatprep.mubr.f32.mxu0 0.0
  %331 = vmatmul.mubr.f32.gmra.mxu0 %v255
  %v332 = vpop.f32.mrf.mxu0
  %v333 = vadd.f32 %v236, %v332
  %v334 = vpop.f32.mrf.mxu0
  %335 = vmatprep.mubr.f32.mxu0 0.0
  %336 = vmatmul.mubr.f32.gmra.mxu0 %v258
  %v337 = vpop.f32.mrf.mxu0
  %v338 = vadd.f32 %v241, %v337
  %v339 = vpop.f32.mrf.mxu0
  %340 = vmatprep.mubr.f32.mxu0 0.0
  %341 = vmatmul.mubr.f32.gmra.mxu0 %v261
  %v342 = vpop.f32.mrf.mxu0
  %v343 = vadd.f32 %v246, %v342
  %v344 = vpop.f32.mrf.mxu0
  %345 = vmatprep.mubr.f32.mxu0 0.0
  %346 = vmatmul.mubr.f32.gmra.mxu0 %v264
  %v347 = vpop.f32.mrf.mxu0
  %v348 = vadd.f32 %v251, %v347
  %v349 = vpop.f32.mrf.mxu0
  %350 = vdwg.mxu0
  %v351 = vtanh.pop %v333
  %v352 = vtanh.pop %v338
  %v353 = vtanh.pop %v343
  %v354 = vtanh.pop %v348
  %v355 = vld [vmem:[%s5] sm:$0x3]
  %v356 = vld [vmem:[%s6] sm:$0x3]
  %358 = vset.pattern.permute.xlu0 0
  %359 = vperm.xlu0 %358, %v356
  %v360 = vpop.permute.xlu0 %359
  %vm362 = vcmask 261120
  %v364 = vsel %vm362, %v355, 0
  %366 = vmatprep.subr.mxu0 0.0
  %367 = vmatpush1.msra.mxu0 0.0
  %368 = vmatprep.subr.mxu0 0.0
  %369 = vmatpush1.msra.mxu0 0.0
  %370 = vmatprep.subr.mxu0 0.0
  %371 = vmatpush1.msra.mxu0 0.0
  %372 = vmatprep.subr.mxu0 0.0
  %373 = vmatpush1.msra.mxu0 0.0
  %374 = vmatprep.subr.mxu0 0.0
  %375 = vmatpush1.msra.mxu0 0.0
  %376 = vmatprep.subr.mxu0 0.0
  %377 = vmatpush1.msra.mxu0 0.0
  %378 = vmatprep.subr.mxu0 0.0
  %379 = vmatpush1.msra.mxu0 0.0
  %380 = vmatprep.subr.mxu0 0.0
  %381 = vmatpush1.msra.mxu0 0.0
  %382 = vmatprep.subr.mxu0 0.0
  %383 = vmatpush1.msra.mxu0 0.0
  %384 = vmatprep.subr.mxu0 0.0
  %385 = vmatpush1.msra.mxu0 0.0
  %386 = vmatprep.subr.mxu0 0.0
  %387 = vmatpush1.msra.mxu0 0.0
  %388 = vmatprep.subr.mxu0 0.0
  %389 = vmatpush1.msra.mxu0 0.0
  %390 = vmatprep.subr.mxu0 0.0
  %391 = vmatpush1.msra.mxu0 %v354
  %392 = vmatprep.subr.mxu0 0.0
  %393 = vmatpush1.msra.mxu0 %v353
  %394 = vmatprep.subr.mxu0 0.0
  %395 = vmatpush1.msra.mxu0 %v352
  %396 = vmatprep.subr.mxu0 0.0
  %397 = vmatpush1.msra.mxu0 %v351
  %398 = vmatprep.subr.mxu0 0.0
  %399 = vmatpush2.msra.mxu0 0.0
  %400 = vmatprep.subr.mxu0 0.0
  %401 = vmatpush2.msra.mxu0 0.0
  %402 = vmatprep.subr.mxu0 0.0
  %403 = vmatpush2.msra.mxu0 0.0
  %404 = vmatprep.subr.mxu0 0.0
  %405 = vmatpush2.msra.mxu0 0.0
  %406 = vmatprep.subr.mxu0 0.0
  %407 = vmatpush2.msra.mxu0 0.0
  %408 = vmatprep.subr.mxu0 0.0
  %409 = vmatpush2.msra.mxu0 0.0
  %410 = vmatprep.subr.mxu0 0.0
  %411 = vmatpush2.msra.mxu0 0.0
  %412 = vmatprep.subr.mxu0 0.0
  %413 = vmatpush2.msra.mxu0 0.0
  %414 = vmatprep.subr.mxu0 0.0
  %415 = vmatpush2.msra.mxu0 0.0
  %416 = vmatprep.subr.mxu0 0.0
  %417 = vmatpush2.msra.mxu0 0.0
  %418 = vmatprep.subr.mxu0 0.0
  %419 = vmatpush2.msra.mxu0 0.0
  %420 = vmatprep.subr.mxu0 0.0
  %421 = vmatpush2.msra.mxu0 0.0
  %422 = vmatprep.subr.mxu0 0.0
  %423 = vmatpush2.msra.mxu0 0.0
  %424 = vmatprep.subr.mxu0 0.0
  %425 = vmatpush2.msra.mxu0 0.0
  %426 = vmatprep.subr.mxu0 0.0
  %427 = vmatpush2.msra.mxu0 0.0
  %428 = vmatprep.subr.mxu0 0.0
  %429 = vmatpush2.msra.mxu0 0.0
  %430 = vmatprep.mubr.f32.mxu0 0.0
  %431 = vmatmul.mubr.f32.gmra.mxu0 %v364
  %v432 = vpop.f32.mrf.mxu0
  %v433 = vadd.f32 %v360, %v432
  %v434 = vpop.f32.mrf.mxu0
  %435 = vdwg.mxu0
  %436 = vst [vmem:[%s7] sm:$0x3] %v433
  // Predicated region
  $region30: #{mlp_forward.1} parent=0 // pred_check
    _
  $region31: #{mlp_forward.1} parent=0 // pred_check_branch
    %438 = sbr.rel (0) target = $region33
  $region32: #{mlp_forward.1} parent=0 // pred_region
    _
  $region33: #{mlp_forward.1} parent=0 // pred_fallthru
    _
  // Predicated region
  $region34: #{mlp_forward.1} parent=0 // pred_check
    _
  $region35: #{mlp_forward.1} parent=0 // pred_check_branch
    %440 = sbr.rel (0) target = $region37
  $region36: #{mlp_forward.1} parent=0 // pred_region
    _
  $region37: #{mlp_forward.1} parent=0 // pred_fallthru
    _

</llo_original>
